<compile_context>
chip_gen: v7x
topology: tpu7x:2x2x1
jax: 0.10.0
libtpu: 0.0.40
codegen_flags: <defaults>
</compile_context>

<pallas_src>
import jax
import jax.numpy as jnp
from jax.experimental import pallas as pl
from jax.experimental.pallas import tpu as pltpu  # noqa: F401

# ----- small config consistent with the module -----
B, S = 2, 8
T = B * S                              # 16 flattened tokens
HIDDEN = 32
N_HEADS = 4
N_KV_HEADS = 2
HEAD_DIM = HIDDEN // N_HEADS           # 8
INTER = 64
EPS = 1e-6
N_REP = N_HEADS // N_KV_HEADS          # 2
SCALE = float(HEAD_DIM) ** -0.5
Q_DIM = N_HEADS * HEAD_DIM             # 32
KV_DIM = N_KV_HEADS * HEAD_DIM         # 16
HALF = HEAD_DIM // 2

# weight-slab lane layout (kept lane-tile aligned: 0 / 128 / 256)
WGU_LO, WGU_HI = 0, 2 * INTER          # [0, 128)  gate|up
WBIG_LO = 128                          # [128, 240) q*s | qrot*s | k | krot | v
WBIG_HI = WBIG_LO + 2 * Q_DIM + 2 * KV_DIM + KV_DIM   # 240
WO_LO, WO_HI = 256, 256 + HIDDEN       # [256, 288)
WSLAB_W = 288


def decoder_layer_kernel(x_ref, const_ref, wslab_ref, bwd_ref, out_ref):
    x = x_ref[...]                                  # (T, 32)
    cos_q = const_ref[0:T, :]                       # (T, 32)  cos tiled over 4 heads
    sin_q = const_ref[T:2 * T, :]                   # (T, 32)
    ln1 = const_ref[2 * T:2 * T + 1, :]             # (1, 32)
    ln2 = const_ref[2 * T + 1:2 * T + 2, :]         # (1, 32)

    # ---- input RMSNorm ----
    var = jnp.mean(x * x, axis=-1, keepdims=True)
    xn = x * jax.lax.rsqrt(var + EPS) * ln1

    # ---- one fused projection: q*scale | rotate_half(q)*scale | k | rotate_half(k) | v
    # (rotate_half folded into the weights; 1/sqrt(d) folded into q columns)
    proj = jnp.dot(xn, wslab_ref[:, WBIG_LO:WBIG_HI],
                   preferred_element_type=jnp.float32)        # (T, 112)
    q = proj[:, 0:Q_DIM]
    qrot = proj[:, Q_DIM:2 * Q_DIM]
    k = proj[:, 2 * Q_DIM:2 * Q_DIM + KV_DIM]
    krot = proj[:, 2 * Q_DIM + KV_DIM:2 * Q_DIM + 2 * KV_DIM]
    v = proj[:, 2 * Q_DIM + 2 * KV_DIM:2 * Q_DIM + 3 * KV_DIM]

    # ---- RoPE: pure FMAs (no slicing / concat / negate in-kernel) ----
    q_r = q * cos_q + qrot * sin_q                  # (T, 32)
    k_r = k * cos_q[:, 0:KV_DIM] + krot * sin_q[:, 0:KV_DIM]   # (T, 16)

    # ---- stack heads on the sublane axis ----
    q_all = jnp.concatenate(
        [q_r[:, h * HEAD_DIM:(h + 1) * HEAD_DIM] for h in range(N_HEADS)], axis=0)     # (64, 8)
    k_all = jnp.concatenate(
        [k_r[:, g * HEAD_DIM:(g + 1) * HEAD_DIM] for g in range(N_KV_HEADS)], axis=0)  # (32, 8)
    v_all = jnp.concatenate(
        [v[:, g * HEAD_DIM:(g + 1) * HEAD_DIM] for g in range(N_KV_HEADS)], axis=0)    # (32, 8)

    bias = bwd_ref[0:N_HEADS * T, :]                # (64, 32) additive mask (0 / -1e30)
    wd = bwd_ref[N_HEADS * T:N_HEADS * T + INTER, :]  # (64, 32)

    # ---- ONE scores matmul + ONE softmax + ONE PV matmul for all heads ----
    scores = jax.lax.dot_general(q_all, k_all, (((1,), (1,)), ((), ())),
                                 preferred_element_type=jnp.float32)   # (64, 32)
    scores = scores + bias
    m = jnp.max(scores, axis=-1, keepdims=True)
    p = jnp.exp(scores - m)
    l = jnp.sum(p, axis=-1, keepdims=True)
    o_all = jnp.dot(p, v_all, preferred_element_type=jnp.float32)      # (64, 8)
    o_all = o_all * pl.reciprocal(l)                # exact (approx=False) for sdpa parity

    # ---- relayout (N_HEADS*T, D) -> (T, N_HEADS*D) : sublane-aligned row slices + 1 concat
    attn = jnp.concatenate(
        [o_all[h * T:(h + 1) * T, :] for h in range(N_HEADS)], axis=-1)  # (T, 32)

    attn = jnp.dot(attn, wslab_ref[:, WO_LO:WO_HI],
                   preferred_element_type=jnp.float32)

    # ---- residual + post-attention RMSNorm ----
    h1 = x + attn
    var2 = jnp.mean(h1 * h1, axis=-1, keepdims=True)
    hn = h1 * jax.lax.rsqrt(var2 + EPS) * ln2

    # ---- MLP: down(silu(gate) * up), gate|up fused (lane-dense 128-wide) ----
    gu = jnp.dot(hn, wslab_ref[:, WGU_LO:WGU_HI],
                 preferred_element_type=jnp.float32)           # (T, 128)
    g = gu[:, :INTER]
    u = gu[:, INTER:]
    act = g * jax.nn.sigmoid(g)                                # silu
    mlp = jnp.dot(act * u, wd, preferred_element_type=jnp.float32)

    out_ref[...] = h1 + mlp


def prepare(params, cos, sin):
    """One-time packing of weights / constants (hoisted out of the per-call path)."""
    # rotate_half as a right-multiply: per-head 8x8 block with the sign folded in.
    z = jnp.zeros((HALF, HALF), jnp.float32)
    eye = jnp.eye(HALF, dtype=jnp.float32)
    blk = jnp.block([[z, eye], [-eye, z]])                    # x @ blk == rotate_half(x)
    p_q = jnp.kron(jnp.eye(N_HEADS, dtype=jnp.float32), blk)      # (32, 32)
    p_k = jnp.kron(jnp.eye(N_KV_HEADS, dtype=jnp.float32), blk)   # (16, 16)

    wq_s = params["wq"] * SCALE
    wbig = jnp.concatenate(
        [wq_s, (params["wq"] @ p_q) * SCALE,
         params["wk"], params["wk"] @ p_k, params["wv"]], axis=1)          # (32, 112)
    wslab = jnp.concatenate(
        [jnp.concatenate([params["wg"], params["wu"]], axis=1),            # (32, 128)
         wbig,
         jnp.zeros((HIDDEN, WO_LO - WBIG_HI), jnp.float32),                # pad to lane tile
         params["wo"]], axis=1)                                            # (32, 288)

    # constants slab: cos|sin tiled over heads + the two RMSNorm weights
    cos2d = cos.reshape(T, HEAD_DIM)
    sin2d = sin.reshape(T, HEAD_DIM)
    const = jnp.concatenate(
        [jnp.tile(cos2d, (1, N_HEADS)), jnp.tile(sin2d, (1, N_HEADS)),
         params["ln1"].reshape(1, HIDDEN), params["ln2"].reshape(1, HIDDEN)], axis=0)  # (34, 32)

    # additive mask over (head, token) x (kv_head, token): causal within a batch
    # AND query head's KV group must match the key's KV head.
    r = jnp.arange(N_HEADS * T)
    c = jnp.arange(N_KV_HEADS * T)
    h, t = r // T, r % T
    kv, tp = c // T, c % T
    valid = ((h[:, None] // N_REP == kv[None, :])
             & (t[:, None] // S == tp[None, :] // S)
             & (t[:, None] >= tp[None, :]))
    bias = jnp.where(valid, 0.0, -1e30).astype(jnp.float32)                # (64, 32)

    bwd = jnp.concatenate([bias, params["wd"]], axis=0)                    # (128, 32)
    return {"const": const, "wslab": wslab, "bwd": bwd}


def decoder_layer(x, prepped):
    b, s, hdim = x.shape
    x2d = x.reshape(b * s, hdim)
    out2d = pl.pallas_call(
        decoder_layer_kernel,
        out_shape=jax.ShapeDtypeStruct((b * s, hdim), jnp.float32),
        # no grid: whole (tiny) problem resident in VMEM, single invocation.
        # At production sizes: add a token-tile grid (parallel over batch for
        # v7x's 2 TCs) and cast matmul operands to bf16 on v6e/v7x.
    )(x2d, prepped["const"], prepped["wslab"], prepped["bwd"])
    return out2d.reshape(b, s, hdim)


# ---------- pure-JAX reference (for correctness check) ----------
def reference(x, cos, sin, p):
    def rms(h, w):
        var = jnp.mean(h * h, axis=-1, keepdims=True)
        return h * jax.lax.rsqrt(var + EPS) * w

    def rot(t):
        return jnp.concatenate([-t[..., HALF:], t[..., :HALF]], axis=-1)

    xn = rms(x, p["ln1"])
    q = xn @ p["wq"]
    k = xn @ p["wk"]
    v = xn @ p["wv"]
    q = q.reshape(B, S, N_HEADS, HEAD_DIM).transpose(0, 2, 1, 3)
    k = k.reshape(B, S, N_KV_HEADS, HEAD_DIM).transpose(0, 2, 1, 3)
    v = v.reshape(B, S, N_KV_HEADS, HEAD_DIM).transpose(0, 2, 1, 3)
    cos_ = cos[:, None, :, :]
    sin_ = sin[:, None, :, :]
    q = q * cos_ + rot(q) * sin_
    k = k * cos_ + rot(k) * sin_
    k = jnp.repeat(k, N_REP, axis=1)
    v = jnp.repeat(v, N_REP, axis=1)
    scores = jnp.einsum("bhqd,bhkd->bhqk", q, k) * SCALE
    mask = jnp.tril(jnp.ones((S, S), bool))
    scores = jnp.where(mask, scores, -1e30)
    w = jax.nn.softmax(scores, axis=-1)
    o = jnp.einsum("bhqk,bhkd->bhqd", w, v)
    o = o.transpose(0, 2, 1, 3).reshape(B, S, N_HEADS * HEAD_DIM)
    h1 = x + o @ p["wo"]
    hn = rms(h1, p["ln2"])
    mlp = (jax.nn.silu(hn @ p["wg"]) * (hn @ p["wu"])) @ p["wd"]
    return h1 + mlp


if __name__ == "__main__":
    key = jax.random.PRNGKey(0)
    ks = jax.random.split(key, 8)

    def init(k, shape, fan_in):
        return jax.random.normal(k, shape, jnp.float32) / jnp.sqrt(jnp.float32(fan_in))

    params = {
        "ln1": jnp.ones((HIDDEN,), jnp.float32),        # RMSNorm init = ones
        "ln2": jnp.ones((HIDDEN,), jnp.float32),
        "wq": init(ks[0], (HIDDEN, N_HEADS * HEAD_DIM), HIDDEN),
        "wk": init(ks[1], (HIDDEN, N_KV_HEADS * HEAD_DIM), HIDDEN),
        "wv": init(ks[2], (HIDDEN, N_KV_HEADS * HEAD_DIM), HIDDEN),
        "wo": init(ks[3], (N_HEADS * HEAD_DIM, HIDDEN), N_HEADS * HEAD_DIM),
        "wg": init(ks[4], (HIDDEN, INTER), HIDDEN),
        "wu": init(ks[5], (HIDDEN, INTER), HIDDEN),
        "wd": init(ks[6], (INTER, HIDDEN), INTER),
    }

    x = jax.random.normal(ks[7], (B, S, HIDDEN), jnp.float32)

    # rotary position embeddings (standard LLaMA rotary, base 10000)
    pos = jnp.arange(S, dtype=jnp.float32)
    inv_freq = 1.0 / (10000.0 ** (jnp.arange(0, HEAD_DIM, 2, dtype=jnp.float32) / HEAD_DIM))
    freqs = jnp.outer(pos, inv_freq)                       # (S, D/2)
    emb = jnp.concatenate([freqs, freqs], axis=-1)         # (S, D)
    cos = jnp.broadcast_to(jnp.cos(emb)[None], (B, S, HEAD_DIM)).astype(jnp.float32)
    sin = jnp.broadcast_to(jnp.sin(emb)[None], (B, S, HEAD_DIM)).astype(jnp.float32)

    prepped = jax.tree_util.tree_map(jax.block_until_ready, prepare(params, cos, sin))

    out = decoder_layer(x, prepped)
    out = jax.block_until_ready(out)

    ref = jax.block_until_ready(reference(x, cos, sin, params))
    max_err = float(jnp.max(jnp.abs(out - ref)))
    assert jnp.all(jnp.isfinite(out)), "non-finite output"
    assert max_err < 2e-2, f"mismatch vs reference: {max_err}"

    print("KERNEL_OK")
</pallas_src>

<mosaic_0001>
module attributes {stable_mosaic.version = 11 : i64} {
  func.func @decoder_layer_kernel(%arg0: memref<16x32xf32, #tpu.memory_space<vmem>>, %arg1: memref<34x32xf32, #tpu.memory_space<vmem>>, %arg2: memref<32x288xf32, #tpu.memory_space<vmem>>, %arg3: memref<128x32xf32, #tpu.memory_space<vmem>>, %arg4: memref<16x32xf32, #tpu.memory_space<vmem>>) attributes {dimension_semantics = [], scalar_prefetch = 0 : i64, scratch_operands = 0 : i64, tpu.core_type = #tpu.core_type<tc>} {
    %c0 = arith.constant 0 : index
    %c0_0 = arith.constant 0 : index
    %0 = vector.load %arg0[%c0, %c0_0] : memref<16x32xf32, #tpu.memory_space<vmem>>, vector<16x32xf32>
    %c0_1 = arith.constant 0 : index
    %c0_2 = arith.constant 0 : index
    %1 = vector.load %arg1[%c0_1, %c0_2] : memref<34x32xf32, #tpu.memory_space<vmem>>, vector<16x32xf32>
    %c16 = arith.constant 16 : index
    %c0_3 = arith.constant 0 : index
    %2 = vector.load %arg1[%c16, %c0_3] : memref<34x32xf32, #tpu.memory_space<vmem>>, vector<16x32xf32>
    %c32 = arith.constant 32 : index
    %c0_4 = arith.constant 0 : index
    %3 = vector.load %arg1[%c32, %c0_4] : memref<34x32xf32, #tpu.memory_space<vmem>>, vector<1x32xf32>
    %c33 = arith.constant 33 : index
    %c0_5 = arith.constant 0 : index
    %4 = vector.load %arg1[%c33, %c0_5] : memref<34x32xf32, #tpu.memory_space<vmem>>, vector<1x32xf32>
    %5 = arith.mulf %0, %0 : vector<16x32xf32>
    %cst = arith.constant dense<0.000000e+00> : vector<16xf32>
    %6 = vector.multi_reduction <add>, %5, %cst [1] : vector<16x32xf32> to vector<16xf32>
    %7 = vector.shape_cast %6 : vector<16xf32> to vector<16x1xf32>
    %cst_6 = arith.constant 3.200000e+01 : f32
    %8 = vector.broadcast %cst_6 : f32 to vector<16x1xf32>
    %9 = arith.divf %7, %8 : vector<16x1xf32>
    %cst_7 = arith.constant 9.99999997E-7 : f32
    %10 = vector.broadcast %cst_7 : f32 to vector<16x1xf32>
    %11 = arith.addf %9, %10 : vector<16x1xf32>
    %12 = math.rsqrt %11 : vector<16x1xf32>
    %13 = vector.broadcast %12 : vector<16x1xf32> to vector<16x32xf32>
    %14 = arith.mulf %0, %13 : vector<16x32xf32>
    %15 = vector.broadcast %3 : vector<1x32xf32> to vector<16x32xf32>
    %16 = arith.mulf %14, %15 : vector<16x32xf32>
    %c0_8 = arith.constant 0 : index
    %c128 = arith.constant 128 : index
    %17 = vector.load %arg2[%c0_8, %c128] : memref<32x288xf32, #tpu.memory_space<vmem>>, vector<32x112xf32>
    %cst_9 = arith.constant dense<0.000000e+00> : vector<16x112xf32>
    %18 = tpu.matmul %16, %17, %cst_9 {dimension_numbers = #tpu.dot_dimension_numbers<[1], [0], [0], [1], [0, 0, 1, 1], [], []>} : vector<16x32xf32>, vector<32x112xf32>, vector<16x112xf32> -> vector<16x112xf32>
    %19 = vector.extract_strided_slice %18 {offsets = [0, 0], sizes = [16, 32], strides = [1, 1]} : vector<16x112xf32> to vector<16x32xf32>
    %20 = vector.extract_strided_slice %18 {offsets = [0, 32], sizes = [16, 32], strides = [1, 1]} : vector<16x112xf32> to vector<16x32xf32>
    %21 = vector.extract_strided_slice %18 {offsets = [0, 64], sizes = [16, 16], strides = [1, 1]} : vector<16x112xf32> to vector<16x16xf32>
    %22 = vector.extract_strided_slice %18 {offsets = [0, 80], sizes = [16, 16], strides = [1, 1]} : vector<16x112xf32> to vector<16x16xf32>
    %23 = vector.extract_strided_slice %18 {offsets = [0, 96], sizes = [16, 16], strides = [1, 1]} : vector<16x112xf32> to vector<16x16xf32>
    %24 = arith.mulf %19, %1 : vector<16x32xf32>
    %25 = arith.mulf %20, %2 : vector<16x32xf32>
    %26 = arith.addf %24, %25 : vector<16x32xf32>
    %27 = vector.extract_strided_slice %1 {offsets = [0, 0], sizes = [16, 16], strides = [1, 1]} : vector<16x32xf32> to vector<16x16xf32>
    %28 = arith.mulf %21, %27 : vector<16x16xf32>
    %29 = vector.extract_strided_slice %2 {offsets = [0, 0], sizes = [16, 16], strides = [1, 1]} : vector<16x32xf32> to vector<16x16xf32>
    %30 = arith.mulf %22, %29 : vector<16x16xf32>
    %31 = arith.addf %28, %30 : vector<16x16xf32>
    %32 = vector.extract_strided_slice %26 {offsets = [0, 0], sizes = [16, 8], strides = [1, 1]} : vector<16x32xf32> to vector<16x8xf32>
    %33 = vector.extract_strided_slice %26 {offsets = [0, 8], sizes = [16, 8], strides = [1, 1]} : vector<16x32xf32> to vector<16x8xf32>
    %34 = vector.extract_strided_slice %26 {offsets = [0, 16], sizes = [16, 8], strides = [1, 1]} : vector<16x32xf32> to vector<16x8xf32>
    %35 = vector.extract_strided_slice %26 {offsets = [0, 24], sizes = [16, 8], strides = [1, 1]} : vector<16x32xf32> to vector<16x8xf32>
    %36 = tpu.concatenate %32, %33, %34, %35 in 0 : vector<16x8xf32>, vector<16x8xf32>, vector<16x8xf32>, vector<16x8xf32> -> vector<64x8xf32>
    %37 = vector.extract_strided_slice %31 {offsets = [0, 0], sizes = [16, 8], strides = [1, 1]} : vector<16x16xf32> to vector<16x8xf32>
    %38 = vector.extract_strided_slice %31 {offsets = [0, 8], sizes = [16, 8], strides = [1, 1]} : vector<16x16xf32> to vector<16x8xf32>
    %39 = tpu.concatenate %37, %38 in 0 : vector<16x8xf32>, vector<16x8xf32> -> vector<32x8xf32>
    %40 = vector.extract_strided_slice %23 {offsets = [0, 0], sizes = [16, 8], strides = [1, 1]} : vector<16x16xf32> to vector<16x8xf32>
    %41 = vector.extract_strided_slice %23 {offsets = [0, 8], sizes = [16, 8], strides = [1, 1]} : vector<16x16xf32> to vector<16x8xf32>
    %42 = tpu.concatenate %40, %41 in 0 : vector<16x8xf32>, vector<16x8xf32> -> vector<32x8xf32>
    %c0_10 = arith.constant 0 : index
    %c0_11 = arith.constant 0 : index
    %43 = vector.load %arg3[%c0_10, %c0_11] : memref<128x32xf32, #tpu.memory_space<vmem>>, vector<64x32xf32>
    %c64 = arith.constant 64 : index
    %c0_12 = arith.constant 0 : index
    %44 = vector.load %arg3[%c64, %c0_12] : memref<128x32xf32, #tpu.memory_space<vmem>>, vector<64x32xf32>
    %cst_13 = arith.constant dense<0.000000e+00> : vector<64x32xf32>
    %45 = tpu.matmul %36, %39, %cst_13 {dimension_numbers = #tpu.dot_dimension_numbers<[1], [1], [0], [0], [0, 0, 1, 0], [], []>} : vector<64x8xf32>, vector<32x8xf32>, vector<64x32xf32> -> vector<64x32xf32>
    %46 = arith.addf %45, %43 : vector<64x32xf32>
    %cst_14 = arith.constant dense<0xFF800000> : vector<64xf32>
    %47 = vector.multi_reduction <maximumf>, %46, %cst_14 [1] : vector<64x32xf32> to vector<64xf32>
    %48 = vector.shape_cast %47 : vector<64xf32> to vector<64x1xf32>
    %49 = vector.broadcast %48 : vector<64x1xf32> to vector<64x32xf32>
    %50 = arith.subf %46, %49 : vector<64x32xf32>
    %51 = math.exp %50 : vector<64x32xf32>
    %cst_15 = arith.constant dense<0.000000e+00> : vector<64xf32>
    %52 = vector.multi_reduction <add>, %51, %cst_15 [1] : vector<64x32xf32> to vector<64xf32>
    %53 = vector.shape_cast %52 : vector<64xf32> to vector<64x1xf32>
    %cst_16 = arith.constant dense<0.000000e+00> : vector<64x8xf32>
    %54 = tpu.matmul %51, %42, %cst_16 {dimension_numbers = #tpu.dot_dimension_numbers<[1], [0], [0], [1], [0, 0, 1, 1], [], []>} : vector<64x32xf32>, vector<32x8xf32>, vector<64x8xf32> -> vector<64x8xf32>
    %55 = tpu.reciprocal %53 : vector<64x1xf32> -> vector<64x1xf32>
    %56 = vector.broadcast %55 : vector<64x1xf32> to vector<64x8xf32>
    %57 = arith.mulf %54, %56 : vector<64x8xf32>
    %58 = vector.extract_strided_slice %57 {offsets = [0, 0], sizes = [16, 8], strides = [1, 1]} : vector<64x8xf32> to vector<16x8xf32>
    %59 = vector.extract_strided_slice %57 {offsets = [16, 0], sizes = [16, 8], strides = [1, 1]} : vector<64x8xf32> to vector<16x8xf32>
    %60 = vector.extract_strided_slice %57 {offsets = [32, 0], sizes = [16, 8], strides = [1, 1]} : vector<64x8xf32> to vector<16x8xf32>
    %61 = vector.extract_strided_slice %57 {offsets = [48, 0], sizes = [16, 8], strides = [1, 1]} : vector<64x8xf32> to vector<16x8xf32>
    %62 = tpu.concatenate %58, %59, %60, %61 in 1 : vector<16x8xf32>, vector<16x8xf32>, vector<16x8xf32>, vector<16x8xf32> -> vector<16x32xf32>
    %c0_17 = arith.constant 0 : index
    %c256 = arith.constant 256 : index
    %63 = vector.load %arg2[%c0_17, %c256] : memref<32x288xf32, #tpu.memory_space<vmem>>, vector<32x32xf32>
    %cst_18 = arith.constant dense<0.000000e+00> : vector<16x32xf32>
    %64 = tpu.matmul %62, %63, %cst_18 {dimension_numbers = #tpu.dot_dimension_numbers<[1], [0], [0], [1], [0, 0, 1, 1], [], []>} : vector<16x32xf32>, vector<32x32xf32>, vector<16x32xf32> -> vector<16x32xf32>
    %65 = arith.addf %0, %64 : vector<16x32xf32>
    %66 = arith.mulf %65, %65 : vector<16x32xf32>
    %cst_19 = arith.constant dense<0.000000e+00> : vector<16xf32>
    %67 = vector.multi_reduction <add>, %66, %cst_19 [1] : vector<16x32xf32> to vector<16xf32>
    %68 = vector.shape_cast %67 : vector<16xf32> to vector<16x1xf32>
    %cst_20 = arith.constant 3.200000e+01 : f32
    %69 = vector.broadcast %cst_20 : f32 to vector<16x1xf32>
    %70 = arith.divf %68, %69 : vector<16x1xf32>
    %cst_21 = arith.constant 9.99999997E-7 : f32
    %71 = vector.broadcast %cst_21 : f32 to vector<16x1xf32>
    %72 = arith.addf %70, %71 : vector<16x1xf32>
    %73 = math.rsqrt %72 : vector<16x1xf32>
    %74 = vector.broadcast %73 : vector<16x1xf32> to vector<16x32xf32>
    %75 = arith.mulf %65, %74 : vector<16x32xf32>
    %76 = vector.broadcast %4 : vector<1x32xf32> to vector<16x32xf32>
    %77 = arith.mulf %75, %76 : vector<16x32xf32>
    %c0_22 = arith.constant 0 : index
    %c0_23 = arith.constant 0 : index
    %78 = vector.load %arg2[%c0_22, %c0_23] : memref<32x288xf32, #tpu.memory_space<vmem>>, vector<32x128xf32>
    %cst_24 = arith.constant dense<0.000000e+00> : vector<16x128xf32>
    %79 = tpu.matmul %77, %78, %cst_24 {dimension_numbers = #tpu.dot_dimension_numbers<[1], [0], [0], [1], [0, 0, 1, 1], [], []>} : vector<16x32xf32>, vector<32x128xf32>, vector<16x128xf32> -> vector<16x128xf32>
    %80 = vector.extract_strided_slice %79 {offsets = [0, 0], sizes = [16, 64], strides = [1, 1]} : vector<16x128xf32> to vector<16x64xf32>
    %81 = vector.extract_strided_slice %79 {offsets = [0, 64], sizes = [16, 64], strides = [1, 1]} : vector<16x128xf32> to vector<16x64xf32>
    %82 = arith.negf %80 : vector<16x64xf32>
    %83 = math.exp %82 : vector<16x64xf32>
    %cst_25 = arith.constant 1.000000e+00 : f32
    %84 = vector.broadcast %cst_25 : f32 to vector<16x64xf32>
    %85 = arith.addf %84, %83 : vector<16x64xf32>
    %86 = arith.divf %84, %85 : vector<16x64xf32>
    %87 = arith.mulf %80, %86 : vector<16x64xf32>
    %88 = arith.mulf %87, %81 : vector<16x64xf32>
    %cst_26 = arith.constant dense<0.000000e+00> : vector<16x32xf32>
    %89 = tpu.matmul %88, %44, %cst_26 {dimension_numbers = #tpu.dot_dimension_numbers<[1], [0], [0], [1], [0, 0, 1, 1], [], []>} : vector<16x64xf32>, vector<64x32xf32>, vector<16x32xf32> -> vector<16x32xf32>
    %90 = arith.addf %65, %89 : vector<16x32xf32>
    %c0_27 = arith.constant 0 : index
    %c0_28 = arith.constant 0 : index
    %91 = vector.load %arg4[%c0_27, %c0_28] : memref<16x32xf32, #tpu.memory_space<vmem>>, vector<16x32xf32>
    tpu.vector_store %arg4[%c0_27, %c0_28], %90 {strides = array<i32>} : memref<16x32xf32, #tpu.memory_space<vmem>>, vector<16x32xf32>,
    return
  }
}

</mosaic_0001>

<llo_original>
// kernel: tpu_custom_call.1
$region0: #{tpu_custom_call.1}
  #allocation0 [shape = 'u32[]', space=smem, size = 0x4, offset = 0x4, fixed_abs, tag = 'smem constant byte address 0x4 - core index']
  #allocation1 [shape = 'u32[144,128]{1,0:T(1,128)}', space=vmem, size = 0x12000, scoped, tag = 'internal scratch']
  %s0 = inlined_call_operand.vmem [shape: f32[16,32], index: 0, kind: input, shape index: {}]
  %s1 = inlined_call_operand.vmem [shape: f32[34,32], index: 1, kind: input, shape index: {}]
  %s2 = inlined_call_operand.vmem [shape: f32[32,288], index: 2, kind: input, shape index: {}]
  %s3 = inlined_call_operand.vmem [shape: f32[128,32], index: 3, kind: input, shape index: {}]
  %s4 = inlined_call_operand.hbm [shape: f32[16,32], index: 4, kind: output, shape index: {}]
  %s5 = sld [smem:[#allocation0]]
  $region26: #{tpu_custom_call.1} parent=0
    _
  %s7 = ssub.s32 1, %s5
  %s8 = scalar_select 0, %s7, %s5
  $region1: #{tpu_custom_call.1} parent=0
    #allocation2 [shape = 'u8[8192]{0}', space=vmem, size = 0x2000, scoped, tag = 'output window, operand 0, single buffered']
    #allocation3 [shape = 's32[1]{0}', space=sflag, size = 0x4, scoped, tag = 'scoped memory for tpu_custom_call.1']
    %9 = vsyncpa [#allocation3], 0
    // Predicated region
    $region2: #{tpu_custom_call.1} parent=1 // pred_check
      _
    $region3: #{tpu_custom_call.1} parent=1 // pred_check_branch
      %11 = sbr.rel (0) target = $region5
    $region4: #{tpu_custom_call.1} parent=1 // pred_region
      _
    $region5: #{tpu_custom_call.1} parent=1 // pred_fallthru
      _
    // Predicated region
    $region6: #{tpu_custom_call.1} parent=1 // pred_check
      _
    $region7: #{tpu_custom_call.1} parent=1 // pred_check_branch
      %13 = sbr.rel (0) target = $region9
    $region8: #{tpu_custom_call.1} parent=1 // pred_region
      _
    $region9: #{tpu_custom_call.1} parent=1 // pred_fallthru
      _
    // Predicated region
    $region10: #{tpu_custom_call.1} parent=1 // pred_check
      _
    $region11: #{tpu_custom_call.1} parent=1 // pred_check_branch
      %15 = sbr.rel (0) target = $region13
    $region12: #{tpu_custom_call.1} parent=1 // pred_region
      _
    $region13: #{tpu_custom_call.1} parent=1 // pred_fallthru
      _
    // Predicated region
    $region14: #{tpu_custom_call.1} parent=1 // pred_check
      _
    $region15: #{tpu_custom_call.1} parent=1 // pred_check_branch
      %17 = sbr.rel (0) target = $region17
    $region16: #{tpu_custom_call.1} parent=1 // pred_region
      _
    $region17: #{tpu_custom_call.1} parent=1 // pred_fallthru
      _
    %v18 = vld [vmem:[%s0] sm:$0xff]
    %v19 = vld [vmem:[%s0 + $0x8] sm:$0xff]
    %v20 = vld [vmem:[%s1] sm:$0xff]
    %v21 = vld [vmem:[%s1 + $0x8] sm:$0xff]
    %v22 = vld [vmem:[%s1 + $0x10] sm:$0xff]
    %v23 = vld [vmem:[%s1 + $0x18] sm:$0xff]
    %v24 = vld [vmem:[%s1 + $0x20] sm:$0x1]
    %v25 = vld [vmem:[%s1 + $0x21] sm:$0x1]
    %v26 = vmul.f32 %v18, %v18
    %v27 = vmul.f32 %v19, %v19
    %vm28 = vcmask 261120
    %v29 = vsel %vm28, %v26, 0.0
    %30 = vadd.xlane.f32.xlu0 %v29
    %v31 = vpop.xlane.xlu0 %30
    %v32 = vsel %vm28, %v27, 0.0
    %33 = vadd.xlane.f32.xlu0 %v32
    %v34 = vpop.xlane.xlu0 %33
    %v35 = vrcp.pop 32.0
    %v36 = vmul.f32 %v31, %v35
    %v37 = vmul.f32 %v34, %v35
    %v38 = vadd.f32 %v36, 1e-06
    %v39 = vadd.f32 %v37, 1e-06
    %v40 = vrsqrt.pop %v38
    %v41 = vrsqrt.pop %v39
    %v42 = vmul.f32 %v18, %v40
    %v43 = vmul.f32 %v19, %v41
    %v44 = vlaneseq
    %v45 = vshrl.u32 %v44, 7
    %v46 = vsub.s32 0, %v45
    %v47 = vrot.slane %v24, %v46
    %v48 = vmul.f32 %v42, %v47
    %v49 = vmul.f32 %v43, %v47
    %v50 = vld [vmem:[%s2 + $0x8] sm:$0xff]
    %v51 = vld [vmem:[%s2 + $0x20] sm:$0xff]
    %v52 = vld [vmem:[%s2 + $0x38] sm:$0xff]
    %v53 = vld [vmem:[%s2 + $0x50] sm:$0xff]
    %v55 = vsel %vm28, %v48, 0
    %v58 = vsel %vm28, %v49, 0
    %60 = vmatprep.subr.mxu0 0.0
    %61 = vmatpush1.msra.mxu0 %v50
    %62 = vmatprep.subr.mxu0 0.0
    %63 = vmatpush1.msra.mxu0 %v51
    %64 = vmatprep.subr.mxu0 0.0
    %65 = vmatpush1.msra.mxu0 %v52
    %66 = vmatprep.subr.mxu0 0.0
    %67 = vmatpush1.msra.mxu0 %v53
    %68 = vmatprep.subr.mxu0 0.0
    %69 = vmatpush1.msra.mxu0 0.0
    %70 = vmatprep.subr.mxu0 0.0
    %71 = vmatpush1.msra.mxu0 0.0
    %72 = vmatprep.subr.mxu0 0.0
    %73 = vmatpush1.msra.mxu0 0.0
    %74 = vmatprep.subr.mxu0 0.0
    %75 = vmatpush1.msra.mxu0 0.0
    %76 = vmatprep.subr.mxu0 0.0
    %77 = vmatpush1.msra.mxu0 0.0
    %78 = vmatprep.subr.mxu0 0.0
    %79 = vmatpush1.msra.mxu0 0.0
    %80 = vmatprep.subr.mxu0 0.0
    %81 = vmatpush1.msra.mxu0 0.0
    %82 = vmatprep.subr.mxu0 0.0
    %83 = vmatpush1.msra.mxu0 0.0
    %84 = vmatprep.subr.mxu0 0.0
    %85 = vmatpush1.msra.mxu0 0.0
    %86 = vmatprep.subr.mxu0 0.0
    %87 = vmatpush1.msra.mxu0 0.0
    %88 = vmatprep.subr.mxu0 0.0
    %89 = vmatpush1.msra.mxu0 0.0
    %90 = vmatprep.subr.mxu0 0.0
    %91 = vmatpush1.msra.mxu0 0.0
    %92 = vmatprep.subr.mxu0 0.0
    %93 = vmatpush1.msra.mxu0 0.0
    %94 = vmatprep.subr.mxu0 0.0
    %95 = vmatpush1.msra.mxu0 0.0
    %96 = vmatprep.subr.mxu0 0.0
    %97 = vmatpush1.msra.mxu0 0.0
    %98 = vmatprep.subr.mxu0 0.0
    %99 = vmatpush1.msra.mxu0 0.0
    %100 = vmatprep.subr.mxu0 0.0
    %101 = vmatpush1.msra.mxu0 0.0
    %102 = vmatprep.subr.mxu0 0.0
    %103 = vmatpush1.msra.mxu0 0.0
    %104 = vmatprep.subr.mxu0 0.0
    %105 = vmatpush1.msra.mxu0 0.0
    %106 = vmatprep.subr.mxu0 0.0
    %107 = vmatpush1.msra.mxu0 0.0
    %108 = vmatprep.subr.mxu0 0.0
    %109 = vmatpush1.msra.mxu0 0.0
    %110 = vmatprep.subr.mxu0 0.0
    %111 = vmatpush1.msra.mxu0 0.0
    %112 = vmatprep.subr.mxu0 0.0
    %113 = vmatpush1.msra.mxu0 0.0
    %114 = vmatprep.subr.mxu0 0.0
    %115 = vmatpush1.msra.mxu0 0.0
    %116 = vmatprep.subr.mxu0 0.0
    %117 = vmatpush1.msra.mxu0 0.0
    %118 = vmatprep.subr.mxu0 0.0
    %119 = vmatpush1.msra.mxu0 0.0
    %120 = vmatprep.subr.mxu0 0.0
    %121 = vmatpush1.msra.mxu0 0.0
    %122 = vmatprep.subr.mxu0 0.0
    %123 = vmatpush1.msra.mxu0 0.0
    %124 = vmatprep.mubr.f32.mxu0 0.0
    %125 = vmatmul.mubr.f32.gmra.mrb[0].mxu0 %v55
    %v126 = vpop.f32.mrb[0].mxu0
    %v127 = vadd.f32 0.0, %v126
    %v128 = vpop.f32.mrb[0].mxu0
    %129 = vmatprep.mubr.f32.mxu0 0.0
    %130 = vmatmul.mubr.f32.gmra.mrb[0].mxu0 %v58
    %v131 = vpop.f32.mrb[0].mxu0
    %v132 = vadd.f32 0.0, %v131
    %v133 = vpop.f32.mrb[0].mxu0
    %134 = vdwg.mxu0
    %v135 = vmul.f32 %v127, %v20
    %v136 = vmul.f32 %v132, %v21
    %139 = vrot.lane.b32.xlu0 %v22, 32
    %v140 = vpop.permute.xlu0 %139
    %141 = vrot.lane.b32.xlu0 %v23, 32
    %v142 = vpop.permute.xlu0 %141
    %v145 = vmul.f32 %v127, %v140
    %v146 = vmul.f32 %v132, %v142
    %149 = vrot.lane.b32.xlu0 %v145, 96
    %v150 = vpop.permute.xlu0 %149
    %151 = vrot.lane.b32.xlu0 %v146, 96
    %v152 = vpop.permute.xlu0 %151
    %v155 = vadd.f32 %v135, %v150
    %v156 = vadd.f32 %v136, %v152
    %159 = vrot.lane.b32.xlu0 %v20, 64
    %v160 = vpop.permute.xlu0 %159
    %161 = vrot.lane.b32.xlu0 %v21, 64
    %v162 = vpop.permute.xlu0 %161
    %v165 = vmul.f32 %v127, %v160
    %v166 = vmul.f32 %v132, %v162
    %167 = vrot.lane.b32.xlu0 %v22, 80
    %v168 = vpop.permute.xlu0 %167
    %169 = vrot.lane.b32.xlu0 %v23, 80
    %v170 = vpop.permute.xlu0 %169
    %v173 = vmul.f32 %v127, %v168
    %v174 = vmul.f32 %v132, %v170
    %177 = vrot.lane.b32.xlu0 %v173, 112
    %v178 = vpop.permute.xlu0 %177
    %179 = vrot.lane.b32.xlu0 %v174, 112
    %v180 = vpop.permute.xlu0 %179
    %v183 = vadd.f32 %v165, %v178
    %v184 = vadd.f32 %v166, %v180
    %187 = vrot.lane.b32.xlu0 %v155, 120
    %v188 = vpop.permute.xlu0 %187
    %189 = vrot.lane.b32.xlu0 %v156, 120
    %v190 = vpop.permute.xlu0 %189
    %191 = vrot.lane.b32.xlu0 %v155, 112
    %v192 = vpop.permute.xlu0 %191
    %193 = vrot.lane.b32.xlu0 %v156, 112
    %v194 = vpop.permute.xlu0 %193
    %195 = vrot.lane.b32.xlu0 %v155, 104
    %v196 = vpop.permute.xlu0 %195
    %197 = vrot.lane.b32.xlu0 %v156, 104
    %v198 = vpop.permute.xlu0 %197
    %201 = vrot.lane.b32.xlu0 %v183, 120
    %v202 = vpop.permute.xlu0 %201
    %203 = vrot.lane.b32.xlu0 %v184, 120
    %v204 = vpop.permute.xlu0 %203
    %207 = vrot.lane.b32.xlu0 %v127, 120
    %v208 = vpop.permute.xlu0 %207
    %209 = vrot.lane.b32.xlu0 %v132, 120
    %v210 = vpop.permute.xlu0 %209
    %v211 = vld [vmem:[%s3] sm:$0xff]
    %v212 = vld [vmem:[%s3 + $0x8] sm:$0xff]
    %v213 = vld [vmem:[%s3 + $0x10] sm:$0xff]
    %v214 = vld [vmem:[%s3 + $0x18] sm:$0xff]
    %v215 = vld [vmem:[%s3 + $0x20] sm:$0xff]
    %v216 = vld [vmem:[%s3 + $0x28] sm:$0xff]
    %v217 = vld [vmem:[%s3 + $0x30] sm:$0xff]
    %v218 = vld [vmem:[%s3 + $0x38] sm:$0xff]
    %v219 = vld [vmem:[%s3 + $0x40] sm:$0xff]
    %v220 = vld [vmem:[%s3 + $0x48] sm:$0xff]
    %v221 = vld [vmem:[%s3 + $0x50] sm:$0xff]
    %v222 = vld [vmem:[%s3 + $0x58] sm:$0xff]
    %v223 = vld [vmem:[%s3 + $0x60] sm:$0xff]
    %v224 = vld [vmem:[%s3 + $0x68] sm:$0xff]
    %v225 = vld [vmem:[%s3 + $0x70] sm:$0xff]
    %v226 = vld [vmem:[%s3 + $0x78] sm:$0xff]
    %227 = vrot.lane.b32.xlu0 %v183, 64
    %v228 = vpop.permute.xlu0 %227
    %229 = vrot.lane.b32.xlu0 %v184, 64
    %v230 = vpop.permute.xlu0 %229
    %231 = vrot.lane.b32.xlu0 %v202, 64
    %v232 = vpop.permute.xlu0 %231
    %233 = vrot.lane.b32.xlu0 %v204, 64
    %v234 = vpop.permute.xlu0 %233
    %vm235 = vcmask 64512
    %v236 = vsel %vm235, %v155, 0
    %v238 = vsel %vm235, %v156, 0
    %v240 = vsel %vm235, %v188, 0
    %v242 = vsel %vm235, %v190, 0
    %v244 = vsel %vm235, %v192, 0
    %v246 = vsel %vm235, %v194, 0
    %v248 = vsel %vm235, %v196, 0
    %v250 = vsel %vm235, %v198, 0
    %v252 = vsel %vm235, %v228, 0
    %v254 = vsel %vm235, %v230, 0
    %v256 = vsel %vm235, %v232, 0
    %v258 = vsel %vm235, %v234, 0
    %260 = vmatprep.subr.mxu0 0.0
    %261 = vmatpush1.xpose.msra.mxu0 %v252
    %262 = vmatprep.subr.mxu0 0.0
    %263 = vmatpush1.xpose.msra.mxu0 %v254
    %264 = vmatprep.subr.mxu0 0.0
    %265 = vmatpush1.xpose.msra.mxu0 %v256
    %266 = vmatprep.subr.mxu0 0.0
    %267 = vmatpush1.xpose.msra.mxu0 %v258
    %268 = vmatprep.subr.mxu0 0.0
    %269 = vmatpush1.xpose.msra.mxu0 0.0
    %270 = vmatprep.subr.mxu0 0.0
    %271 = vmatpush1.xpose.msra.mxu0 0.0
    %272 = vmatprep.subr.mxu0 0.0
    %273 = vmatpush1.xpose.msra.mxu0 0.0
    %274 = vmatprep.subr.mxu0 0.0
    %275 = vmatpush1.xpose.msra.mxu0 0.0
    %276 = vmatprep.subr.mxu0 0.0
    %277 = vmatpush1.xpose.msra.mxu0 0.0
    %278 = vmatprep.subr.mxu0 0.0
    %279 = vmatpush1.xpose.msra.mxu0 0.0
    %280 = vmatprep.subr.mxu0 0.0
    %281 = vmatpush1.xpose.msra.mxu0 0.0
    %282 = vmatprep.subr.mxu0 0.0
    %283 = vmatpush1.xpose.msra.mxu0 0.0
    %284 = vmatprep.subr.mxu0 0.0
    %285 = vmatpush1.xpose.msra.mxu0 0.0
    %286 = vmatprep.subr.mxu0 0.0
    %287 = vmatpush1.xpose.msra.mxu0 0.0
    %288 = vmatprep.subr.mxu0 0.0
    %289 = vmatpush1.xpose.msra.mxu0 0.0
    %290 = vmatprep.subr.mxu0 0.0
    %291 = vmatpush1.xpose.msra.mxu0 0.0
    %292 = vmatprep.subr.mxu0 0.0
    %293 = vmatpush1.xpose.msra.mxu0 0.0
    %294 = vmatprep.subr.mxu0 0.0
    %295 = vmatpush1.xpose.msra.mxu0 0.0
    %296 = vmatprep.subr.mxu0 0.0
    %297 = vmatpush1.xpose.msra.mxu0 0.0
    %298 = vmatprep.subr.mxu0 0.0
    %299 = vmatpush1.xpose.msra.mxu0 0.0
    %300 = vmatprep.subr.mxu0 0.0
    %301 = vmatpush1.xpose.msra.mxu0 0.0
    %302 = vmatprep.subr.mxu0 0.0
    %303 = vmatpush1.xpose.msra.mxu0 0.0
    %304 = vmatprep.subr.mxu0 0.0
    %305 = vmatpush1.xpose.msra.mxu0 0.0
    %306 = vmatprep.subr.mxu0 0.0
    %307 = vmatpush1.xpose.msra.mxu0 0.0
    %308 = vmatprep.subr.mxu0 0.0
    %309 = vmatpush1.xpose.msra.mxu0 0.0
    %310 = vmatprep.subr.mxu0 0.0
    %311 = vmatpush1.xpose.msra.mxu0 0.0
    %312 = vmatprep.subr.mxu0 0.0
    %313 = vmatpush1.xpose.msra.mxu0 0.0
    %314 = vmatprep.subr.mxu0 0.0
    %315 = vmatpush1.xpose.msra.mxu0 0.0
    %316 = vmatprep.subr.mxu0 0.0
    %317 = vmatpush1.xpose.msra.mxu0 0.0
    %318 = vmatprep.subr.mxu0 0.0
    %319 = vmatpush1.xpose.msra.mxu0 0.0
    %320 = vmatprep.subr.mxu0 0.0
    %321 = vmatpush1.xpose.msra.mxu0 0.0
    %322 = vmatprep.subr.mxu0 0.0
    %323 = vmatpush1.xpose.msra.mxu0 0.0
    %324 = vmatprep.mubr.f32.mxu0 0.0
    %325 = vmatmul.mubr.f32.gmra.mrb[0].mxu0 %v236
    %v326 = vpop.f32.mrb[0].mxu0
    %v327 = vadd.f32 %v211, %v326
    %v328 = vpop.f32.mrb[0].mxu0
    %329 = vmatprep.mubr.f32.mxu0 0.0
    %330 = vmatmul.mubr.f32.gmra.mrb[0].mxu0 %v238
    %v331 = vpop.f32.mrb[0].mxu0
    %v332 = vadd.f32 %v212, %v331
    %v333 = vpop.f32.mrb[0].mxu0
    %334 = vmatprep.mubr.f32.mxu0 0.0
    %335 = vmatmul.mubr.f32.gmra.mrb[0].mxu0 %v240
    %v336 = vpop.f32.mrb[0].mxu0
    %v337 = vadd.f32 %v213, %v336
    %v338 = vpop.f32.mrb[0].mxu0
    %339 = vmatprep.mubr.f32.mxu0 0.0
    %340 = vmatmul.mubr.f32.gmra.mrb[0].mxu0 %v242
    %v341 = vpop.f32.mrb[0].mxu0
    %v342 = vadd.f32 %v214, %v341
    %v343 = vpop.f32.mrb[0].mxu0
    %344 = vmatprep.mubr.f32.mxu0 0.0
    %345 = vmatmul.mubr.f32.gmra.mrb[0].mxu0 %v244
    %v346 = vpop.f32.mrb[0].mxu0
    %v347 = vadd.f32 %v215, %v346
    %v348 = vpop.f32.mrb[0].mxu0
    %349 = vmatprep.mubr.f32.mxu0 0.0
    %350 = vmatmul.mubr.f32.gmra.mrb[0].mxu0 %v246
    %v351 = vpop.f32.mrb[0].mxu0
    %v352 = vadd.f32 %v216, %v351
    %v353 = vpop.f32.mrb[0].mxu0
    %354 = vmatprep.mubr.f32.mxu0 0.0
    %355 = vmatmul.mubr.f32.gmra.mrb[0].mxu0 %v248
    %v356 = vpop.f32.mrb[0].mxu0
    %v357 = vadd.f32 %v217, %v356
    %v358 = vpop.f32.mrb[0].mxu0
    %359 = vmatprep.mubr.f32.mxu0 0.0
    %360 = vmatmul.mubr.f32.gmra.mrb[0].mxu0 %v250
    %v361 = vpop.f32.mrb[0].mxu0
    %v362 = vadd.f32 %v218, %v361
    %v363 = vpop.f32.mrb[0].mxu0
    %364 = vdwg.mxu0
    %v365 = vsel %vm28, %v327, -inf
    %366 = vmax.xlane.f32.xlu0 %v365
    %v367 = vpop.xlane.xlu0 %366
    %v368 = vsel %vm28, %v332, -inf
    %369 = vmax.xlane.f32.xlu0 %v368
    %v370 = vpop.xlane.xlu0 %369
    %v371 = vsel %vm28, %v337, -inf
    %372 = vmax.xlane.f32.xlu0 %v371
    %v373 = vpop.xlane.xlu0 %372
    %v374 = vsel %vm28, %v342, -inf
    %375 = vmax.xlane.f32.xlu0 %v374
    %v376 = vpop.xlane.xlu0 %375
    %v377 = vsel %vm28, %v347, -inf
    %378 = vmax.xlane.f32.xlu0 %v377
    %v379 = vpop.xlane.xlu0 %378
    %v380 = vsel %vm28, %v352, -inf
    %381 = vmax.xlane.f32.xlu0 %v380
    %v382 = vpop.xlane.xlu0 %381
    %v383 = vsel %vm28, %v357, -inf
    %384 = vmax.xlane.f32.xlu0 %v383
    %v385 = vpop.xlane.xlu0 %384
    %v386 = vsel %vm28, %v362, -inf
    %387 = vmax.xlane.f32.xlu0 %v386
    %v388 = vpop.xlane.xlu0 %387
    %v389 = vsub.f32 %v327, %v367
    %v390 = vsub.f32 %v332, %v370
    %v391 = vsub.f32 %v337, %v373
    %v392 = vsub.f32 %v342, %v376
    %v393 = vsub.f32 %v347, %v379
    %v394 = vsub.f32 %v352, %v382
    %v395 = vsub.f32 %v357, %v385
    %v396 = vsub.f32 %v362, %v388
    %v397 = vmul.f32 %v389, 1.442695
    %v398 = vpow.pop %v397
    %v399 = vmul.f32 %v390, 1.442695
    %v400 = vpow.pop %v399
    %v401 = vmul.f32 %v391, 1.442695
    %v402 = vpow.pop %v401
    %v403 = vmul.f32 %v392, 1.442695
    %v404 = vpow.pop %v403
    %v405 = vmul.f32 %v393, 1.442695
    %v406 = vpow.pop %v405
    %v407 = vmul.f32 %v394, 1.442695
    %v408 = vpow.pop %v407
    %v409 = vmul.f32 %v395, 1.442695
    %v410 = vpow.pop %v409
    %v411 = vmul.f32 %v396, 1.442695
    %v412 = vpow.pop %v411
    %v413 = vsel %vm28, %v398, 0.0
    %414 = vadd.xlane.f32.xlu0 %v413
    %v415 = vpop.xlane.xlu0 %414
    %v416 = vsel %vm28, %v400, 0.0
    %417 = vadd.xlane.f32.xlu0 %v416
    %v418 = vpop.xlane.xlu0 %417
    %v419 = vsel %vm28, %v402, 0.0
    %420 = vadd.xlane.f32.xlu0 %v419
    %v421 = vpop.xlane.xlu0 %420
    %v422 = vsel %vm28, %v404, 0.0
    %423 = vadd.xlane.f32.xlu0 %v422
    %v424 = vpop.xlane.xlu0 %423
    %v425 = vsel %vm28, %v406, 0.0
    %426 = vadd.xlane.f32.xlu0 %v425
    %v427 = vpop.xlane.xlu0 %426
    %v428 = vsel %vm28, %v408, 0.0
    %429 = vadd.xlane.f32.xlu0 %v428
    %v430 = vpop.xlane.xlu0 %429
    %v431 = vsel %vm28, %v410, 0.0
    %432 = vadd.xlane.f32.xlu0 %v431
    %v433 = vpop.xlane.xlu0 %432
    %v434 = vsel %vm28, %v412, 0.0
    %435 = vadd.xlane.f32.xlu0 %v434
    %v436 = vpop.xlane.xlu0 %435
    %437 = vrot.lane.b32.xlu0 %v127, 32
    %v438 = vpop.permute.xlu0 %437
    %439 = vrot.lane.b32.xlu0 %v132, 32
    %v440 = vpop.permute.xlu0 %439
    %441 = vrot.lane.b32.xlu0 %v208, 32
    %v442 = vpop.permute.xlu0 %441
    %443 = vrot.lane.b32.xlu0 %v210, 32
    %v444 = vpop.permute.xlu0 %443
    %v450 = vsel %vm28, %v398, 0
    %v453 = vsel %vm28, %v400, 0
    %v456 = vsel %vm28, %v402, 0
    %v459 = vsel %vm28, %v404, 0
    %v462 = vsel %vm28, %v406, 0
    %v465 = vsel %vm28, %v408, 0
    %v468 = vsel %vm28, %v410, 0
    %v471 = vsel %vm28, %v412, 0
    %473 = vmatprep.subr.mxu0 0.0
    %474 = vmatpush1.msra.mxu0 %v438
    %475 = vmatprep.subr.mxu0 0.0
    %476 = vmatpush1.msra.mxu0 %v440
    %477 = vmatprep.subr.mxu0 0.0
    %478 = vmatpush1.msra.mxu0 %v442
    %479 = vmatprep.subr.mxu0 0.0
    %480 = vmatpush1.msra.mxu0 %v444
    %481 = vmatprep.subr.mxu0 0.0
    %482 = vmatpush1.msra.mxu0 0.0
    %483 = vmatprep.subr.mxu0 0.0
    %484 = vmatpush1.msra.mxu0 0.0
    %485 = vmatprep.subr.mxu0 0.0
    %486 = vmatpush1.msra.mxu0 0.0
    %487 = vmatprep.subr.mxu0 0.0
    %488 = vmatpush1.msra.mxu0 0.0
    %489 = vmatprep.subr.mxu0 0.0
    %490 = vmatpush1.msra.mxu0 0.0
    %491 = vmatprep.subr.mxu0 0.0
    %492 = vmatpush1.msra.mxu0 0.0
    %493 = vmatprep.subr.mxu0 0.0
    %494 = vmatpush1.msra.mxu0 0.0
    %495 = vmatprep.subr.mxu0 0.0
    %496 = vmatpush1.msra.mxu0 0.0
    %497 = vmatprep.subr.mxu0 0.0
    %498 = vmatpush1.msra.mxu0 0.0
    %499 = vmatprep.subr.mxu0 0.0
    %500 = vmatpush1.msra.mxu0 0.0
    %501 = vmatprep.subr.mxu0 0.0
    %502 = vmatpush1.msra.mxu0 0.0
    %503 = vmatprep.subr.mxu0 0.0
    %504 = vmatpush1.msra.mxu0 0.0
    %505 = vmatprep.subr.mxu0 0.0
    %506 = vmatpush1.msra.mxu0 0.0
    %507 = vmatprep.subr.mxu0 0.0
    %508 = vmatpush1.msra.mxu0 0.0
    %509 = vmatprep.subr.mxu0 0.0
    %510 = vmatpush1.msra.mxu0 0.0
    %511 = vmatprep.subr.mxu0 0.0
    %512 = vmatpush1.msra.mxu0 0.0
    %513 = vmatprep.subr.mxu0 0.0
    %514 = vmatpush1.msra.mxu0 0.0
    %515 = vmatprep.subr.mxu0 0.0
    %516 = vmatpush1.msra.mxu0 0.0
    %517 = vmatprep.subr.mxu0 0.0
    %518 = vmatpush1.msra.mxu0 0.0
    %519 = vmatprep.subr.mxu0 0.0
    %520 = vmatpush1.msra.mxu0 0.0
    %521 = vmatprep.subr.mxu0 0.0
    %522 = vmatpush1.msra.mxu0 0.0
    %523 = vmatprep.subr.mxu0 0.0
    %524 = vmatpush1.msra.mxu0 0.0
    %525 = vmatprep.subr.mxu0 0.0
    %526 = vmatpush1.msra.mxu0 0.0
    %527 = vmatprep.subr.mxu0 0.0
    %528 = vmatpush1.msra.mxu0 0.0
    %529 = vmatprep.subr.mxu0 0.0
    %530 = vmatpush1.msra.mxu0 0.0
    %531 = vmatprep.subr.mxu0 0.0
    %532 = vmatpush1.msra.mxu0 0.0
    %533 = vmatprep.subr.mxu0 0.0
    %534 = vmatpush1.msra.mxu0 0.0
    %535 = vmatprep.subr.mxu0 0.0
    %536 = vmatpush1.msra.mxu0 0.0
    %537 = vmatprep.mubr.f32.mxu0 0.0
    %538 = vmatmul.mubr.f32.gmra.mrb[0].mxu0 %v450
    %v539 = vpop.f32.mrb[0].mxu0
    %v540 = vadd.f32 0.0, %v539
    %v541 = vpop.f32.mrb[0].mxu0
    %542 = vmatprep.mubr.f32.mxu0 0.0
    %543 = vmatmul.mubr.f32.gmra.mrb[0].mxu0 %v453
    %v544 = vpop.f32.mrb[0].mxu0
    %v545 = vadd.f32 0.0, %v544
    %v546 = vpop.f32.mrb[0].mxu0
    %547 = vmatprep.mubr.f32.mxu0 0.0
    %548 = vmatmul.mubr.f32.gmra.mrb[0].mxu0 %v456
    %v549 = vpop.f32.mrb[0].mxu0
    %v550 = vadd.f32 0.0, %v549
    %v551 = vpop.f32.mrb[0].mxu0
    %552 = vmatprep.mubr.f32.mxu0 0.0
    %553 = vmatmul.mubr.f32.gmra.mrb[0].mxu0 %v459
    %v554 = vpop.f32.mrb[0].mxu0
    %v555 = vadd.f32 0.0, %v554
    %v556 = vpop.f32.mrb[0].mxu0
    %557 = vmatprep.mubr.f32.mxu0 0.0
    %558 = vmatmul.mubr.f32.gmra.mrb[0].mxu0 %v462
    %v559 = vpop.f32.mrb[0].mxu0
    %v560 = vadd.f32 0.0, %v559
    %v561 = vpop.f32.mrb[0].mxu0
    %562 = vmatprep.mubr.f32.mxu0 0.0
    %563 = vmatmul.mubr.f32.gmra.mrb[0].mxu0 %v465
    %v564 = vpop.f32.mrb[0].mxu0
    %v565 = vadd.f32 0.0, %v564
    %v566 = vpop.f32.mrb[0].mxu0
    %567 = vmatprep.mubr.f32.mxu0 0.0
    %568 = vmatmul.mubr.f32.gmra.mrb[0].mxu0 %v468
    %v569 = vpop.f32.mrb[0].mxu0
    %v570 = vadd.f32 0.0, %v569
    %v571 = vpop.f32.mrb[0].mxu0
    %572 = vmatprep.mubr.f32.mxu0 0.0
    %573 = vmatmul.mubr.f32.gmra.mrb[0].mxu0 %v471
    %v574 = vpop.f32.mrb[0].mxu0
    %v575 = vadd.f32 0.0, %v574
    %v576 = vpop.f32.mrb[0].mxu0
    %577 = vdwg.mxu0
    %v578 = vrcp.pop %v415
    %v579 = vrcp.pop %v418
    %v580 = vrcp.pop %v421
    %v581 = vrcp.pop %v424
    %v582 = vrcp.pop %v427
    %v583 = vrcp.pop %v430
    %v584 = vrcp.pop %v433
    %v585 = vrcp.pop %v436
    %v586 = vmul.f32 %v540, %v578
    %v587 = vmul.f32 %v545, %v579
    %v588 = vmul.f32 %v550, %v580
    %v589 = vmul.f32 %v555, %v581
    %v590 = vmul.f32 %v560, %v582
    %v591 = vmul.f32 %v565, %v583
    %v592 = vmul.f32 %v570, %v584
    %v593 = vmul.f32 %v575, %v585
    %596 = vrot.lane.b32.xlu0 %v588, 8
    %v597 = vpop.permute.xlu0 %596
    %598 = vrot.lane.b32.xlu0 %v589, 8
    %v599 = vpop.permute.xlu0 %598
    %604 = vrot.lane.b32.xlu0 %v590, 16
    %v605 = vpop.permute.xlu0 %604
    %606 = vrot.lane.b32.xlu0 %v591, 16
    %v607 = vpop.permute.xlu0 %606
    %612 = vrot.lane.b32.xlu0 %v592, 24
    %v613 = vpop.permute.xlu0 %612
    %614 = vrot.lane.b32.xlu0 %v593, 24
    %v615 = vpop.permute.xlu0 %614
    %v618 = vsel %vm235, %v586, %v597
    %v619 = vsel %vm235, %v587, %v599
    %vm620 = vcmask 130048
    %v621 = vsel %vm620, %v618, %v605
    %v622 = vsel %vm620, %v619, %v607
    %vm623 = vcmask 195584
    %v624 = vsel %vm623, %v621, %v613
    %v625 = vsel %vm623, %v622, %v615
    %v626 = vld [vmem:[%s2 + $0x10] sm:$0xff]
    %v627 = vld [vmem:[%s2 + $0x28] sm:$0xff]
    %v628 = vld [vmem:[%s2 + $0x40] sm:$0xff]
    %v629 = vld [vmem:[%s2 + $0x58] sm:$0xff]
    %v631 = vsel %vm28, %v624, 0
    %v634 = vsel %vm28, %v625, 0
    %636 = vmatprep.subr.mxu0 0.0
    %637 = vmatpush1.msra.mxu0 %v626
    %638 = vmatprep.subr.mxu0 0.0
    %639 = vmatpush1.msra.mxu0 %v627
    %640 = vmatprep.subr.mxu0 0.0
    %641 = vmatpush1.msra.mxu0 %v628
    %642 = vmatprep.subr.mxu0 0.0
    %643 = vmatpush1.msra.mxu0 %v629
    %644 = vmatprep.subr.mxu0 0.0
    %645 = vmatpush1.msra.mxu0 0.0
    %646 = vmatprep.subr.mxu0 0.0
    %647 = vmatpush1.msra.mxu0 0.0
    %648 = vmatprep.subr.mxu0 0.0
    %649 = vmatpush1.msra.mxu0 0.0
    %650 = vmatprep.subr.mxu0 0.0
    %651 = vmatpush1.msra.mxu0 0.0
    %652 = vmatprep.subr.mxu0 0.0
    %653 = vmatpush1.msra.mxu0 0.0
    %654 = vmatprep.subr.mxu0 0.0
    %655 = vmatpush1.msra.mxu0 0.0
    %656 = vmatprep.subr.mxu0 0.0
    %657 = vmatpush1.msra.mxu0 0.0
    %658 = vmatprep.subr.mxu0 0.0
    %659 = vmatpush1.msra.mxu0 0.0
    %660 = vmatprep.subr.mxu0 0.0
    %661 = vmatpush1.msra.mxu0 0.0
    %662 = vmatprep.subr.mxu0 0.0
    %663 = vmatpush1.msra.mxu0 0.0
    %664 = vmatprep.subr.mxu0 0.0
    %665 = vmatpush1.msra.mxu0 0.0
    %666 = vmatprep.subr.mxu0 0.0
    %667 = vmatpush1.msra.mxu0 0.0
    %668 = vmatprep.subr.mxu0 0.0
    %669 = vmatpush1.msra.mxu0 0.0
    %670 = vmatprep.subr.mxu0 0.0
    %671 = vmatpush1.msra.mxu0 0.0
    %672 = vmatprep.subr.mxu0 0.0
    %673 = vmatpush1.msra.mxu0 0.0
    %674 = vmatprep.subr.mxu0 0.0
    %675 = vmatpush1.msra.mxu0 0.0
    %676 = vmatprep.subr.mxu0 0.0
    %677 = vmatpush1.msra.mxu0 0.0
    %678 = vmatprep.subr.mxu0 0.0
    %679 = vmatpush1.msra.mxu0 0.0
    %680 = vmatprep.subr.mxu0 0.0
    %681 = vmatpush1.msra.mxu0 0.0
    %682 = vmatprep.subr.mxu0 0.0
    %683 = vmatpush1.msra.mxu0 0.0
    %684 = vmatprep.subr.mxu0 0.0
    %685 = vmatpush1.msra.mxu0 0.0
    %686 = vmatprep.subr.mxu0 0.0
    %687 = vmatpush1.msra.mxu0 0.0
    %688 = vmatprep.subr.mxu0 0.0
    %689 = vmatpush1.msra.mxu0 0.0
    %690 = vmatprep.subr.mxu0 0.0
    %691 = vmatpush1.msra.mxu0 0.0
    %692 = vmatprep.subr.mxu0 0.0
    %693 = vmatpush1.msra.mxu0 0.0
    %694 = vmatprep.subr.mxu0 0.0
    %695 = vmatpush1.msra.mxu0 0.0
    %696 = vmatprep.subr.mxu0 0.0
    %697 = vmatpush1.msra.mxu0 0.0
    %698 = vmatprep.subr.mxu0 0.0
    %699 = vmatpush1.msra.mxu0 0.0
    %700 = vmatprep.mubr.f32.mxu0 0.0
    %701 = vmatmul.mubr.f32.gmra.mrb[0].mxu0 %v631
    %v702 = vpop.f32.mrb[0].mxu0
    %v703 = vadd.f32 0.0, %v702
    %v704 = vpop.f32.mrb[0].mxu0
    %705 = vmatprep.mubr.f32.mxu0 0.0
    %706 = vmatmul.mubr.f32.gmra.mrb[0].mxu0 %v634
    %v707 = vpop.f32.mrb[0].mxu0
    %v708 = vadd.f32 0.0, %v707
    %v709 = vpop.f32.mrb[0].mxu0
    %710 = vdwg.mxu0
    %v711 = vadd.f32 %v18, %v703
    %v712 = vadd.f32 %v19, %v708
    %v713 = vmul.f32 %v711, %v711
    %v714 = vmul.f32 %v712, %v712
    %v715 = vsel %vm28, %v713, 0.0
    %716 = vadd.xlane.f32.xlu0 %v715
    %v717 = vpop.xlane.xlu0 %716
    %v718 = vsel %vm28, %v714, 0.0
    %719 = vadd.xlane.f32.xlu0 %v718
    %v720 = vpop.xlane.xlu0 %719
    %v721 = vmul.f32 %v717, %v35
    %v722 = vmul.f32 %v720, %v35
    %v723 = vadd.f32 %v721, 1e-06
    %v724 = vadd.f32 %v722, 1e-06
    %v725 = vrsqrt.pop %v723
    %v726 = vrsqrt.pop %v724
    %v727 = vmul.f32 %v711, %v725
    %v728 = vmul.f32 %v712, %v726
    %v729 = vlaneseq
    %v730 = vshrl.u32 %v729, 7
    %v731 = vsub.s32 0, %v730
    %v732 = vrot.slane %v25, %v731
    %v733 = vmul.f32 %v727, %v732
    %v734 = vmul.f32 %v728, %v732
    %v735 = vld [vmem:[%s2] sm:$0xff]
    %v736 = vld [vmem:[%s2 + $0x18] sm:$0xff]
    %v737 = vld [vmem:[%s2 + $0x30] sm:$0xff]
    %v738 = vld [vmem:[%s2 + $0x48] sm:$0xff]
    %v740 = vsel %vm28, %v733, 0
    %v743 = vsel %vm28, %v734, 0
    %745 = vmatprep.subr.mxu0 0.0
    %746 = vmatpush1.msra.mxu0 %v735
    %747 = vmatprep.subr.mxu0 0.0
    %748 = vmatpush1.msra.mxu0 %v736
    %749 = vmatprep.subr.mxu0 0.0
    %750 = vmatpush1.msra.mxu0 %v737
    %751 = vmatprep.subr.mxu0 0.0
    %752 = vmatpush1.msra.mxu0 %v738
    %753 = vmatprep.subr.mxu0 0.0
    %754 = vmatpush1.msra.mxu0 0.0
    %755 = vmatprep.subr.mxu0 0.0
    %756 = vmatpush1.msra.mxu0 0.0
    %757 = vmatprep.subr.mxu0 0.0
    %758 = vmatpush1.msra.mxu0 0.0
    %759 = vmatprep.subr.mxu0 0.0
    %760 = vmatpush1.msra.mxu0 0.0
    %761 = vmatprep.subr.mxu0 0.0
    %762 = vmatpush1.msra.mxu0 0.0
    %763 = vmatprep.subr.mxu0 0.0
    %764 = vmatpush1.msra.mxu0 0.0
    %765 = vmatprep.subr.mxu0 0.0
    %766 = vmatpush1.msra.mxu0 0.0
    %767 = vmatprep.subr.mxu0 0.0
    %768 = vmatpush1.msra.mxu0 0.0
    %769 = vmatprep.subr.mxu0 0.0
    %770 = vmatpush1.msra.mxu0 0.0
    %771 = vmatprep.subr.mxu0 0.0
    %772 = vmatpush1.msra.mxu0 0.0
    %773 = vmatprep.subr.mxu0 0.0
    %774 = vmatpush1.msra.mxu0 0.0
    %775 = vmatprep.subr.mxu0 0.0
    %776 = vmatpush1.msra.mxu0 0.0
    %777 = vmatprep.subr.mxu0 0.0
    %778 = vmatpush1.msra.mxu0 0.0
    %779 = vmatprep.subr.mxu0 0.0
    %780 = vmatpush1.msra.mxu0 0.0
    %781 = vmatprep.subr.mxu0 0.0
    %782 = vmatpush1.msra.mxu0 0.0
    %783 = vmatprep.subr.mxu0 0.0
    %784 = vmatpush1.msra.mxu0 0.0
    %785 = vmatprep.subr.mxu0 0.0
    %786 = vmatpush1.msra.mxu0 0.0
    %787 = vmatprep.subr.mxu0 0.0
    %788 = vmatpush1.msra.mxu0 0.0
    %789 = vmatprep.subr.mxu0 0.0
    %790 = vmatpush1.msra.mxu0 0.0
    %791 = vmatprep.subr.mxu0 0.0
    %792 = vmatpush1.msra.mxu0 0.0
    %793 = vmatprep.subr.mxu0 0.0
    %794 = vmatpush1.msra.mxu0 0.0
    %795 = vmatprep.subr.mxu0 0.0
    %796 = vmatpush1.msra.mxu0 0.0
    %797 = vmatprep.subr.mxu0 0.0
    %798 = vmatpush1.msra.mxu0 0.0
    %799 = vmatprep.subr.mxu0 0.0
    %800 = vmatpush1.msra.mxu0 0.0
    %801 = vmatprep.subr.mxu0 0.0
    %802 = vmatpush1.msra.mxu0 0.0
    %803 = vmatprep.subr.mxu0 0.0
    %804 = vmatpush1.msra.mxu0 0.0
    %805 = vmatprep.subr.mxu0 0.0
    %806 = vmatpush1.msra.mxu0 0.0
    %807 = vmatprep.subr.mxu0 0.0
    %808 = vmatpush1.msra.mxu0 0.0
    %809 = vmatprep.mubr.f32.mxu0 0.0
    %810 = vmatmul.mubr.f32.gmra.mrb[0].mxu0 %v740
    %v811 = vpop.f32.mrb[0].mxu0
    %v812 = vadd.f32 0.0, %v811
    %v813 = vpop.f32.mrb[0].mxu0
    %814 = vmatprep.mubr.f32.mxu0 0.0
    %815 = vmatmul.mubr.f32.gmra.mrb[0].mxu0 %v743
    %v816 = vpop.f32.mrb[0].mxu0
    %v817 = vadd.f32 0.0, %v816
    %v818 = vpop.f32.mrb[0].mxu0
    %819 = vdwg.mxu0
    %v820 = vxor.u32 %v812, 2147483648
    %v821 = vxor.u32 %v817, 2147483648
    %v822 = vmul.f32 %v820, 1.442695
    %v823 = vpow.pop %v822
    %v824 = vmul.f32 %v821, 1.442695
    %v825 = vpow.pop %v824
    %v826 = vadd.f32 %v823, 1.0
    %v827 = vadd.f32 %v825, 1.0
    %v828 = vrcp.pop %v826
    %v829 = vmul.f32 1.0, %v828
    %v830 = vrcp.pop %v827
    %v831 = vmul.f32 1.0, %v830
    %v832 = vmul.f32 %v812, %v829
    %v833 = vmul.f32 %v817, %v831
    %836 = vrot.lane.b32.xlu0 %v812, 64
    %v837 = vpop.permute.xlu0 %836
    %838 = vrot.lane.b32.xlu0 %v817, 64
    %v839 = vpop.permute.xlu0 %838
    %v842 = vmul.f32 %v832, %v837
    %v843 = vmul.f32 %v833, %v839
    %vm844 = vcmask 523264
    %v846 = vsel %vm844, %v842, 0
    %v849 = vsel %vm844, %v843, 0
    %851 = vmatprep.subr.mxu0 0.0
    %852 = vmatpush1.msra.mxu0 %v219
    %853 = vmatprep.subr.mxu0 0.0
    %854 = vmatpush1.msra.mxu0 %v220
    %855 = vmatprep.subr.mxu0 0.0
    %856 = vmatpush1.msra.mxu0 %v221
    %857 = vmatprep.subr.mxu0 0.0
    %858 = vmatpush1.msra.mxu0 %v222
    %859 = vmatprep.subr.mxu0 0.0
    %860 = vmatpush1.msra.mxu0 %v223
    %861 = vmatprep.subr.mxu0 0.0
    %862 = vmatpush1.msra.mxu0 %v224
    %863 = vmatprep.subr.mxu0 0.0
    %864 = vmatpush1.msra.mxu0 %v225
    %865 = vmatprep.subr.mxu0 0.0
    %866 = vmatpush1.msra.mxu0 %v226
    %867 = vmatprep.subr.mxu0 0.0
    %868 = vmatpush1.msra.mxu0 0.0
    %869 = vmatprep.subr.mxu0 0.0
    %870 = vmatpush1.msra.mxu0 0.0
    %871 = vmatprep.subr.mxu0 0.0
    %872 = vmatpush1.msra.mxu0 0.0
    %873 = vmatprep.subr.mxu0 0.0
    %874 = vmatpush1.msra.mxu0 0.0
    %875 = vmatprep.subr.mxu0 0.0
    %876 = vmatpush1.msra.mxu0 0.0
    %877 = vmatprep.subr.mxu0 0.0
    %878 = vmatpush1.msra.mxu0 0.0
    %879 = vmatprep.subr.mxu0 0.0
    %880 = vmatpush1.msra.mxu0 0.0
    %881 = vmatprep.subr.mxu0 0.0
    %882 = vmatpush1.msra.mxu0 0.0
    %883 = vmatprep.subr.mxu0 0.0
    %884 = vmatpush1.msra.mxu0 0.0
    %885 = vmatprep.subr.mxu0 0.0
    %886 = vmatpush1.msra.mxu0 0.0
    %887 = vmatprep.subr.mxu0 0.0
    %888 = vmatpush1.msra.mxu0 0.0
    %889 = vmatprep.subr.mxu0 0.0
    %890 = vmatpush1.msra.mxu0 0.0
    %891 = vmatprep.subr.mxu0 0.0
    %892 = vmatpush1.msra.mxu0 0.0
    %893 = vmatprep.subr.mxu0 0.0
    %894 = vmatpush1.msra.mxu0 0.0
    %895 = vmatprep.subr.mxu0 0.0
    %896 = vmatpush1.msra.mxu0 0.0
    %897 = vmatprep.subr.mxu0 0.0
    %898 = vmatpush1.msra.mxu0 0.0
    %899 = vmatprep.subr.mxu0 0.0
    %900 = vmatpush1.msra.mxu0 0.0
    %901 = vmatprep.subr.mxu0 0.0
    %902 = vmatpush1.msra.mxu0 0.0
    %903 = vmatprep.subr.mxu0 0.0
    %904 = vmatpush1.msra.mxu0 0.0
    %905 = vmatprep.subr.mxu0 0.0
    %906 = vmatpush1.msra.mxu0 0.0
    %907 = vmatprep.subr.mxu0 0.0
    %908 = vmatpush1.msra.mxu0 0.0
    %909 = vmatprep.subr.mxu0 0.0
    %910 = vmatpush1.msra.mxu0 0.0
    %911 = vmatprep.subr.mxu0 0.0
    %912 = vmatpush1.msra.mxu0 0.0
    %913 = vmatprep.subr.mxu0 0.0
    %914 = vmatpush1.msra.mxu0 0.0
    %915 = vmatprep.mubr.f32.mxu0 0.0
    %916 = vmatmul.mubr.f32.gmra.mrb[0].mxu0 %v846
    %v917 = vpop.f32.mrb[0].mxu0
    %v918 = vadd.f32 0.0, %v917
    %v919 = vpop.f32.mrb[0].mxu0
    %920 = vmatprep.mubr.f32.mxu0 0.0
    %921 = vmatmul.mubr.f32.gmra.mrb[0].mxu0 %v849
    %v922 = vpop.f32.mrb[0].mxu0
    %v923 = vadd.f32 0.0, %v922
    %v924 = vpop.f32.mrb[0].mxu0
    %925 = vdwg.mxu0
    %v926 = vadd.f32 %v711, %v918
    %v927 = vadd.f32 %v712, %v923
    %928 = vst.msk [vmem:[#allocation2] sm:$0xff] %vm28, %v926
    %929 = vst.msk [vmem:[#allocation2 + $0x8] sm:$0xff] %vm28, %v927
    // Predicated region
    $region18: #{tpu_custom_call.1} parent=1 // pred_check
      _
    $region19: #{tpu_custom_call.1} parent=1 // pred_check_branch
      %931 = sbr.rel (0) target = $region21
    $region20: #{tpu_custom_call.1} parent=1 // pred_region
      %s933 = ssub.s32 256, 256
      %934 = vsyncadd [#allocation3], %s933
      %s935 = sshll.u32 [#allocation2], 4
      %s936 = int_to_ptr.vmem [resolvable:$true] %s935
      %941 = dma.vmem_to_hbm [thread:$0]  %s936, 256, %s4, [#allocation3], 128, 128, 8
    $region21: #{tpu_custom_call.1} parent=1 // pred_fallthru
      _
    // Predicated region
    $region22: #{tpu_custom_call.1} parent=1 // pred_check
      _
    $region23: #{tpu_custom_call.1} parent=1 // pred_check_branch
      %943 = sbr.rel (0) target = $region25
    $region24: #{tpu_custom_call.1} parent=1 // pred_region
      %944 = dma.done [#allocation3], 256
    $region25: #{tpu_custom_call.1} parent=1 // pred_fallthru
      _
    %945 = vsyncpa [#allocation3], 1

</llo_original>
